<compile_context>
chip_gen: v5e
topology: v5e:2x2
jax: 0.10.0
libtpu: 0.0.40
codegen_flags: <defaults>
</compile_context>

<pallas_src>
import functools

import jax
import jax.numpy as jnp
from jax.experimental import pallas as pl
from jax.experimental.pallas import tpu as pltpu


# ----------------------------------------------------------------------------
# Small helpers
# ----------------------------------------------------------------------------
def _round_up(x, m):
    return ((x + m - 1) // m) * m


def _pick_tile(m_padded):
    """Largest row tile in {512,256,128,64} that keeps grid length >= 2."""
    for tm in (512, 256, 128, 64):
        if m_padded % tm == 0 and m_padded // tm >= 2:
            return tm
    return min(m_padded, 128)


_VMEM_LIMIT = 32 * 1024 * 1024  # safe on v5e/v6e/v7x, above v5e default


# ----------------------------------------------------------------------------
# Pallas matmul kernels (bf16 MXU operands, f32 epilogue)
# ----------------------------------------------------------------------------
def _mm_kernel(x_ref, w_ref, o_ref, *, relu):
    acc = jnp.dot(x_ref[...], w_ref[...], preferred_element_type=jnp.float32)
    if relu:
        acc = jnp.maximum(acc, 0.0)
    o_ref[...] = acc.astype(o_ref.dtype)


def _mm_bn_kernel(x_ref, w_ref, scale_ref, shift_ref, o_ref, *, relu):
    acc = jnp.dot(x_ref[...], w_ref[...], preferred_element_type=jnp.float32)
    y = acc * scale_ref[...] + shift_ref[...]
    if relu:
        y = jnp.maximum(y, 0.0)
    o_ref[...] = y.astype(o_ref.dtype)


def _mm_bn_res_kernel(x_ref, w_ref, scale_ref, shift_ref, res_ref, o_ref):
    acc = jnp.dot(x_ref[...], w_ref[...], preferred_element_type=jnp.float32)
    y = acc * scale_ref[...] + shift_ref[...] + res_ref[...]
    o_ref[...] = jnp.maximum(y, 0.0).astype(o_ref.dtype)


def matmul_bn(x, w, scale=None, shift=None, *, relu=False, residual=None):
    """y = [relu]((x @ w) [* scale + shift] (+ residual, then relu))."""
    M, K = x.shape
    N = w.shape[1]
    Mp = _round_up(M, 128)
    tm = _pick_tile(Mp)

    xb = x.astype(jnp.bfloat16)
    wb = w.astype(jnp.bfloat16)
    if Mp != M:
        xb = jnp.pad(xb, ((0, Mp - M), (0, 0)))

    in_specs = [
        pl.BlockSpec((tm, K), lambda i: (i, 0)),
        pl.BlockSpec((K, N), lambda i: (0, 0)),
    ]
    args = [xb, wb]
    flops = 2 * Mp * K * N
    bytes_accessed = Mp * K * 2 + K * N * 2 + Mp * N * 4

    if scale is not None:
        in_specs += [pl.BlockSpec((1, N), lambda i: (0, 0)),
                     pl.BlockSpec((1, N), lambda i: (0, 0))]
        args += [scale.reshape(1, N).astype(jnp.float32),
                 shift.reshape(1, N).astype(jnp.float32)]

    if residual is not None:
        res = residual.astype(jnp.float32)
        if Mp != M:
            res = jnp.pad(res, ((0, Mp - M), (0, 0)))
        in_specs.append(pl.BlockSpec((tm, N), lambda i: (i, 0)))
        args.append(res)
        bytes_accessed += Mp * N * 4
        kernel = _mm_bn_res_kernel
    elif scale is not None:
        kernel = functools.partial(_mm_bn_kernel, relu=relu)
    else:
        kernel = functools.partial(_mm_kernel, relu=relu)

    out = pl.pallas_call(
        kernel,
        out_shape=jax.ShapeDtypeStruct((Mp, N), jnp.float32),
        grid=(Mp // tm,),
        in_specs=in_specs,
        out_specs=pl.BlockSpec((tm, N), lambda i: (i, 0)),
        compiler_params=pltpu.CompilerParams(
            dimension_semantics=("parallel",),
            vmem_limit_bytes=_VMEM_LIMIT),
        cost_estimate=pl.CostEstimate(flops=flops, transcendentals=0,
                                      bytes_accessed=bytes_accessed),
    )(*args)
    return out[:M] if Mp != M else out


def _gmm_bn_kernel(x_ref, w_ref, scale_ref, shift_ref, o_ref, *, relu):
    acc = jnp.dot(x_ref[0], w_ref[0], preferred_element_type=jnp.float32)
    y = acc * scale_ref[0] + shift_ref[0]
    if relu:
        y = jnp.maximum(y, 0.0)
    o_ref[0] = y.astype(o_ref.dtype)


def grouped_matmul_bn(x_g, w_g, scale, shift, *, relu=True):
    """Per-group matmul + BN + ReLU.

    x_g: (G, M, K)   (K = 9*Cg group-major im2col patches)
    w_g: (G, K, N)   (N = D/G output channels per group)
    Returns (M, G*N) with group-contiguous output channels.
    """
    G, M, K = x_g.shape
    N = w_g.shape[2]
    Mp = _round_up(M, 128)
    tm = _pick_tile(Mp)

    xb = x_g.astype(jnp.bfloat16)
    wb = w_g.astype(jnp.bfloat16)
    if Mp != M:
        xb = jnp.pad(xb, ((0, 0), (0, Mp - M), (0, 0)))
    s3 = scale.reshape(G, 1, N).astype(jnp.float32)
    b3 = shift.reshape(G, 1, N).astype(jnp.float32)

    out = pl.pallas_call(
        functools.partial(_gmm_bn_kernel, relu=relu),
        out_shape=jax.ShapeDtypeStruct((G, Mp, N), jnp.float32),
        grid=(G, Mp // tm),
        in_specs=[
            pl.BlockSpec((1, tm, K), lambda g, i: (g, i, 0)),
            pl.BlockSpec((1, K, N), lambda g, i: (g, 0, 0)),
            pl.BlockSpec((1, 1, N), lambda g, i: (g, 0, 0)),
            pl.BlockSpec((1, 1, N), lambda g, i: (g, 0, 0)),
        ],
        out_specs=pl.BlockSpec((1, tm, N), lambda g, i: (g, i, 0)),
        compiler_params=pltpu.CompilerParams(
            dimension_semantics=("parallel", "parallel"),
            vmem_limit_bytes=_VMEM_LIMIT),
        cost_estimate=pl.CostEstimate(
            flops=2 * G * Mp * K * N, transcendentals=0,
            bytes_accessed=G * (Mp * K * 2 + K * N * 2 + Mp * N * 4)),
    )(xb, wb, s3, b3)
    if Mp != M:
        out = out[:, :M, :]
    return jnp.transpose(out, (1, 0, 2)).reshape(M, G * N)


# ----------------------------------------------------------------------------
# Deformable bilinear sampling kernel (channel-blocked, lane-dense output)
# ----------------------------------------------------------------------------
def _deform_kernel(x_ref, offy_ref, offx_ref, o_ref):
    """Bilinear sampling of Cb (H, W) slices at grid+offset coordinates.

    Separable bilinear weights: one soft row-one-hot matmul (MXU) plus a
    weighted lane reduction replace the 4-corner gather of
    th_batch_map_coordinates exactly (same clamping / floor-ceil corners).
    """
    Cb, H, W = x_ref.shape
    P = H * W
    x = x_ref[...]                            # (Cb, H, W) f32
    offy = offy_ref[...]                      # (Cb, P) f32
    offx = offx_ref[...]

    p = jax.lax.broadcasted_iota(jnp.int32, (1, P), 1)
    gy = (p // W).astype(jnp.float32)
    gx = (p % W).astype(jnp.float32)

    cy_f = jnp.clip(offy + gy, 0.0, float(H - 1))   # (Cb, P)
    cx_f = jnp.clip(offx + gx, 0.0, float(W - 1))

    fy = jnp.floor(cy_f)
    fx = jnp.floor(cx_f)
    ty = (cy_f - fy)[:, :, None]              # (Cb, P, 1)
    tx = (cx_f - fx)[:, :, None]

    fy_i = fy.astype(jnp.int32)[:, :, None]
    cy_i = jnp.ceil(cy_f).astype(jnp.int32)[:, :, None]
    fx_i = fx.astype(jnp.int32)[:, :, None]
    cx_i = jnp.ceil(cx_f).astype(jnp.int32)[:, :, None]

    h_iota = jax.lax.broadcasted_iota(jnp.int32, (Cb, P, H), 2)
    w_iota = jax.lax.broadcasted_iota(jnp.int32, (Cb, P, W), 2)

    # Separable bilinear weights (duplicate floor/ceil index => weight 1).
    wy = (jnp.where(h_iota == fy_i, 1.0 - ty, 0.0)
          + jnp.where(h_iota == cy_i, ty, 0.0))          # (Cb, P, H)
    wx = (jnp.where(w_iota == fx_i, 1.0 - tx, 0.0)
          + jnp.where(w_iota == cx_i, tx, 0.0))          # (Cb, P, W)

    rows = jax.lax.dot_general(                            # (Cb, P, W)
        wy, x,
        dimension_numbers=(((2,), (1,)), ((0,), (0,))),
        preferred_element_type=jnp.float32)
    o_ref[...] = jnp.sum(rows * wx, axis=2)                # (Cb, P)


def deform_sample(x_bc, off_y, off_x, *, cb=8):
    """x_bc: (B*C, H, W); off_y/off_x: (B*C, H*W) -> (B*C, H*W)."""
    BC, H, W = x_bc.shape
    P = H * W
    BCp = _round_up(BC, cb)
    if BCp != BC:
        pad = BCp - BC
        x_bc = jnp.pad(x_bc, ((0, pad), (0, 0), (0, 0)))
        off_y = jnp.pad(off_y, ((0, pad), (0, 0)))
        off_x = jnp.pad(off_x, ((0, pad), (0, 0)))

    out = pl.pallas_call(
        _deform_kernel,
        out_shape=jax.ShapeDtypeStruct((BCp, P), jnp.float32),
        grid=(BCp // cb,),
        in_specs=[
            pl.BlockSpec((cb, H, W), lambda i: (i, 0, 0)),
            pl.BlockSpec((cb, P), lambda i: (i, 0)),
            pl.BlockSpec((cb, P), lambda i: (i, 0)),
        ],
        out_specs=pl.BlockSpec((cb, P), lambda i: (i, 0)),
        compiler_params=pltpu.CompilerParams(
            dimension_semantics=("parallel",),
            vmem_limit_bytes=_VMEM_LIMIT),
    )(x_bc.astype(jnp.float32), off_y.astype(jnp.float32),
      off_x.astype(jnp.float32))
    return out[:BC] if BCp != BC else out


# ----------------------------------------------------------------------------
# Plain-JAX glue: im2col (bf16 patches), weight-layout conversion, BN folding
# ----------------------------------------------------------------------------
def im2col(x_nhwc, ksize, stride, pad, *, dtype=jnp.bfloat16):
    B, H, W, C = x_nhwc.shape
    xp = jnp.pad(x_nhwc, ((0, 0), (pad, pad), (pad, pad), (0, 0))).astype(dtype)
    Ho = (H + 2 * pad - ksize) // stride + 1
    Wo = (W + 2 * pad - ksize) // stride + 1
    cols = []
    for ky in range(ksize):
        for kx in range(ksize):
            cols.append(xp[:, ky:ky + (Ho - 1) * stride + 1:stride,
                           kx:kx + (Wo - 1) * stride + 1:stride, :])
    patches = jnp.concatenate(cols, axis=-1)           # (B, Ho, Wo, k*k*C)
    return patches.reshape(B * Ho * Wo, ksize * ksize * C), Ho, Wo


def im2col_grouped(x_nhwc, groups, ksize, stride, pad, *, dtype=jnp.bfloat16):
    """Group-major im2col: (G, B*Ho*Wo, k*k*Cg) with inner layout [(ky,kx),cg]."""
    B, H, W, C = x_nhwc.shape
    Cg = C // groups
    xp = jnp.pad(x_nhwc, ((0, 0), (pad, pad), (pad, pad), (0, 0))).astype(dtype)
    Hp, Wp = H + 2 * pad, W + 2 * pad
    xg = jnp.transpose(xp.reshape(B, Hp, Wp, groups, Cg), (3, 0, 1, 2, 4))
    Ho = (H + 2 * pad - ksize) // stride + 1
    Wo = (W + 2 * pad - ksize) // stride + 1
    cols = []
    for ky in range(ksize):
        for kx in range(ksize):
            cols.append(xg[:, :, ky:ky + (Ho - 1) * stride + 1:stride,
                           kx:kx + (Wo - 1) * stride + 1:stride, :])
    patches = jnp.concatenate(cols, axis=-1)           # (G, B, Ho, Wo, k*k*Cg)
    return patches.reshape(groups, B * Ho * Wo, ksize * ksize * Cg), Ho, Wo


def conv3x3_weight_to_mat(w_oikk):
    """torch (O, I, 3, 3) -> (9*I, O), matching im2col ordering [(ky,kx), cin]."""
    O, I, KH, KW = w_oikk.shape
    return jnp.transpose(w_oikk, (2, 3, 1, 0)).reshape(KH * KW * I, O)


def grouped_conv3x3_weight(w_ocgkk, groups):
    """torch grouped (O, Cg, 3, 3) -> (G, 9*Cg, O/G), rows ordered [(ky,kx), cg]."""
    O, Cg, KH, KW = w_ocgkk.shape
    Og = O // groups
    wt = jnp.transpose(w_ocgkk, (2, 3, 1, 0)).reshape(KH * KW * Cg, O)
    return jnp.stack([wt[:, g * Og:(g + 1) * Og] for g in range(groups)], axis=0)


def fold_bn(gamma, beta, mean, var, eps=1e-5):
    scale = gamma / jnp.sqrt(var + eps)
    shift = beta - mean * scale
    return scale, shift


# ----------------------------------------------------------------------------
# Module: parameters + forward
# ----------------------------------------------------------------------------
def init_params(key, in_channels, out_channels, cardinality, widen_factor):
    D = cardinality * out_channels // widen_factor
    Cg = D // cardinality
    ks = jax.random.split(key, 24)

    def normal(k, shape, std):
        return std * jax.random.normal(k, shape, dtype=jnp.float32)

    def bn(k, c):
        k1, k2, k3, k4 = jax.random.split(k, 4)
        gamma = 1.0 + 0.1 * jax.random.normal(k1, (c,), dtype=jnp.float32)
        beta = 0.1 * jax.random.normal(k2, (c,), dtype=jnp.float32)
        mean = 0.1 * jax.random.normal(k3, (c,), dtype=jnp.float32)
        var = 0.9 + 0.2 * jax.random.uniform(k4, (c,), dtype=jnp.float32)
        return fold_bn(gamma, beta, mean, var)

    p = {"D": D, "cardinality": cardinality}
    # conv_reduce: torch (D, Cin, 1, 1) -> (Cin, D)
    p["w_reduce"] = jnp.transpose(normal(ks[0], (D, in_channels), 0.1))
    p["bn_reduce"] = bn(ks[1], D)
    # ConvOffset2D internal conv: torch (2D, D, 3, 3), init std 0.01
    p["w_offset"] = conv3x3_weight_to_mat(normal(ks[2], (2 * D, D, 3, 3), 0.01))
    # grouped conv_conv: torch (D, Cg, 3, 3) -> (G, 9*Cg, D/G)
    p["w_conv"] = grouped_conv3x3_weight(normal(ks[3], (D, Cg, 3, 3), 0.1),
                                         cardinality)
    p["bn"] = bn(ks[4], D)
    # conv_expand: torch (Cout, D, 1, 1) -> (D, Cout)
    p["w_expand"] = jnp.transpose(normal(ks[5], (out_channels, D), 0.1))
    p["bn_expand"] = bn(ks[6], out_channels)
    # shortcut (only used when in_channels != out_channels)
    p["w_short"] = jnp.transpose(normal(ks[7], (out_channels, in_channels), 0.1))
    p["bn_short"] = bn(ks[8], out_channels)
    return p


def deform_resnext_bottleneck(x_nchw, params, *, stride):
    B, Cin, H, W = x_nchw.shape
    D = params["D"]
    G = params["cardinality"]
    Cout = params["w_expand"].shape[1]
    x_nhwc = jnp.transpose(x_nchw, (0, 2, 3, 1))

    # 1) conv_reduce (1x1) + bn_reduce + ReLU
    s, b = params["bn_reduce"]
    b1 = matmul_bn(x_nhwc.reshape(B * H * W, Cin), params["w_reduce"],
                   s, b, relu=True)                       # (B*H*W, D) f32
    b1_nhwc = b1.reshape(B, H, W, D)

    # 2) ConvOffset2D: 3x3 conv D -> 2D (no BN), then bilinear sampling
    patches, _, _ = im2col(b1_nhwc, 3, 1, 1)              # (B*H*W, 9D) bf16
    off = matmul_bn(patches, params["w_offset"])          # (B*H*W, 2D) f32
    off_nchw = jnp.transpose(off.reshape(B, H, W, 2 * D), (0, 3, 1, 2))
    # exact torch view semantics: (B, 2D, H, W).view(B*D, H, W, 2).view(B*D, HW, 2)
    off_bc = off_nchw.reshape(B * D, H * W, 2)
    off_y = off_bc[..., 0]
    off_x = off_bc[..., 1]
    x_bc = jnp.transpose(b1_nhwc, (0, 3, 1, 2)).reshape(B * D, H, W)
    sampled = deform_sample(x_bc, off_y, off_x)           # (B*D, H*W) f32
    b2_nhwc = jnp.transpose(sampled.reshape(B, D, H, W), (0, 2, 3, 1))

    # 3) grouped 3x3 conv (stride) + bn + ReLU (per-group matmul, no zero blocks)
    patches_g, Ho, Wo = im2col_grouped(b2_nhwc, G, 3, stride, 1)
    s, b = params["bn"]
    b3 = grouped_matmul_bn(patches_g, params["w_conv"], s, b, relu=True)

    # 4) shortcut
    if Cin != Cout:
        x_sub = x_nhwc[:, ::stride, ::stride, :].reshape(B * Ho * Wo, Cin)
        s, b = params["bn_short"]
        residual = matmul_bn(x_sub, params["w_short"], s, b)
    else:
        residual = x_nhwc.reshape(B * H * W, Cout)        # identity (stride==1)

    # 5) conv_expand + bn_expand + residual add + final ReLU (fused in kernel)
    s, b = params["bn_expand"]
    out = matmul_bn(b3, params["w_expand"], s, b, residual=residual)
    return jnp.transpose(out.reshape(B, Ho, Wo, Cout), (0, 3, 1, 2))


# ----------------------------------------------------------------------------
if __name__ == "__main__":
    key = jax.random.PRNGKey(0)
    kx, kp = jax.random.split(key)

    B, Cin, H, W = 2, 8, 16, 16
    Cout, stride, cardinality, widen_factor = 16, 2, 4, 4

    x = jax.random.normal(kx, (B, Cin, H, W), dtype=jnp.float32)
    params = init_params(kp, Cin, Cout, cardinality, widen_factor)

    out = deform_resnext_bottleneck(x, params, stride=stride)
    out = jax.block_until_ready(out)

    Ho = (H + 2 - 3) // stride + 1
    assert out.shape == (B, Cout, Ho, Ho), out.shape
    assert bool(jnp.all(jnp.isfinite(out)))
    assert bool(jnp.all(out >= 0.0))  # final ReLU
    print("KERNEL_OK")
</pallas_src>

<mosaic_0001>
module attributes {stable_mosaic.version = 11 : i64} {
  func.func @_mm_bn_kernel(%arg0: i32, %arg1: memref<256x8xbf16, #tpu.memory_space<vmem>>, %arg2: memref<8x16xbf16, #tpu.memory_space<vmem>>, %arg3: memref<1x16xf32, #tpu.memory_space<vmem>>, %arg4: memref<1x16xf32, #tpu.memory_space<vmem>>, %arg5: memref<256x16xf32, #tpu.memory_space<vmem>>) attributes {dimension_semantics = [#tpu.dimension_semantics<parallel>], iteration_bounds = array<i64: 2>, scalar_prefetch = 0 : i64, scratch_operands = 0 : i64, tpu.core_type = #tpu.core_type<tc>, window_params = [{transform_indices = @transform_0, window_bounds = array<i64: 256, 8>}, {pipeline_mode = #tpu.pipeline_mode<synchronous>, transform_indices = @transform_1, window_bounds = array<i64: 8, 16>}, {pipeline_mode = #tpu.pipeline_mode<synchronous>, transform_indices = @transform_2, window_bounds = array<i64: 1, 16>}, {pipeline_mode = #tpu.pipeline_mode<synchronous>, transform_indices = @transform_3, window_bounds = array<i64: 1, 16>}, {transform_indices = @transform_4, window_bounds = array<i64: 256, 16>}]} {
    %c0 = arith.constant 0 : index
    %c0_0 = arith.constant 0 : index
    %0 = vector.load %arg1[%c0, %c0_0] : memref<256x8xbf16, #tpu.memory_space<vmem>>, vector<256x8xbf16>
    %c0_1 = arith.constant 0 : index
    %c0_2 = arith.constant 0 : index
    %1 = vector.load %arg2[%c0_1, %c0_2] : memref<8x16xbf16, #tpu.memory_space<vmem>>, vector<8x16xbf16>
    %cst = arith.constant dense<0.000000e+00> : vector<256x16xf32>
    %2 = tpu.matmul %0, %1, %cst {dimension_numbers = #tpu.dot_dimension_numbers<[1], [0], [0], [1], [0, 0, 1, 1], [], []>} : vector<256x8xbf16>, vector<8x16xbf16>, vector<256x16xf32> -> vector<256x16xf32>
    %c0_3 = arith.constant 0 : index
    %c0_4 = arith.constant 0 : index
    %3 = vector.load %arg3[%c0_3, %c0_4] : memref<1x16xf32, #tpu.memory_space<vmem>>, vector<1x16xf32>
    %4 = vector.broadcast %3 : vector<1x16xf32> to vector<256x16xf32>
    %5 = arith.mulf %2, %4 : vector<256x16xf32>
    %c0_5 = arith.constant 0 : index
    %c0_6 = arith.constant 0 : index
    %6 = vector.load %arg4[%c0_5, %c0_6] : memref<1x16xf32, #tpu.memory_space<vmem>>, vector<1x16xf32>
    %7 = vector.broadcast %6 : vector<1x16xf32> to vector<256x16xf32>
    %8 = arith.addf %5, %7 : vector<256x16xf32>
    %cst_7 = arith.constant 0.000000e+00 : f32
    %9 = vector.broadcast %cst_7 : f32 to vector<256x16xf32>
    %10 = arith.maximumf %8, %9 : vector<256x16xf32>
    %c0_8 = arith.constant 0 : index
    %c0_9 = arith.constant 0 : index
    %11 = vector.load %arg5[%c0_8, %c0_9] : memref<256x16xf32, #tpu.memory_space<vmem>>, vector<256x16xf32>
    tpu.vector_store %arg5[%c0_8, %c0_9], %10 {strides = array<i32>} : memref<256x16xf32, #tpu.memory_space<vmem>>, vector<256x16xf32>,
    return
  }
  func.func @transform_0(%arg0: i32) -> (i32, i32) {
    %c0_i32 = arith.constant 0 : i32
    %c0_i32_0 = arith.constant 0 : i32
    return %arg0, %c0_i32 : i32, i32
  }
  func.func @transform_1(%arg0: i32) -> (i32, i32) {
    %c0_i32 = arith.constant 0 : i32
    %c0_i32_0 = arith.constant 0 : i32
    %c0_i32_1 = arith.constant 0 : i32
    return %c0_i32, %c0_i32_0 : i32, i32
  }
  func.func @transform_2(%arg0: i32) -> (i32, i32) {
    %c0_i32 = arith.constant 0 : i32
    %c0_i32_0 = arith.constant 0 : i32
    %c0_i32_1 = arith.constant 0 : i32
    return %c0_i32, %c0_i32_0 : i32, i32
  }
  func.func @transform_3(%arg0: i32) -> (i32, i32) {
    %c0_i32 = arith.constant 0 : i32
    %c0_i32_0 = arith.constant 0 : i32
    %c0_i32_1 = arith.constant 0 : i32
    return %c0_i32, %c0_i32_0 : i32, i32
  }
  func.func @transform_4(%arg0: i32) -> (i32, i32) {
    %c0_i32 = arith.constant 0 : i32
    %c0_i32_0 = arith.constant 0 : i32
    return %arg0, %c0_i32 : i32, i32
  }
}

</mosaic_0001>

<llo_original>
// kernel: tpu_custom_call.1
$region0: #{tpu_custom_call.1}
  #allocation0 [shape = 'u32[]', space=smem, size = 0x4, offset = 0x4, fixed_abs, tag = 'smem constant byte address 0x4 - core index']
  #allocation1 [shape = 'u32[72,128]{1,0:T(1,128)}', space=vmem, size = 0x9000, scoped, tag = 'internal scratch']
  %s0 = inlined_call_operand.vmem [shape: bf16[512,8], index: 0, kind: input, shape index: {}]
  %s1 = inlined_call_operand.vmem [shape: bf16[8,16], index: 1, kind: input, shape index: {}]
  %s2 = inlined_call_operand.vmem [shape: f32[1,16], index: 2, kind: input, shape index: {}]
  %s3 = inlined_call_operand.vmem [shape: f32[1,16], index: 3, kind: input, shape index: {}]
  %s4 = inlined_call_operand.vmem [shape: f32[512,16], index: 4, kind: output, shape index: {}]
  %s5 = sld [smem:[#allocation0]]
  $region49: #{tpu_custom_call.1} parent=0
    _
  %s7 = ssub.s32 1, %s5
  %s8 = scalar_select 0, %s7, %s5
  loop: start=0, step=1, limit=4
  $region2: #{tpu_custom_call.1} parent=0 // loop_pre_header
    _
  $region3: #{tpu_custom_call.1} parent=0 // loop_header
    %s10 = sphi 0, %s14
    %p11 = scmp.ge.s32.totalorder %s10, 4
    %s20 = sphi 0, %s22
    %s23 = sphi 0, %s20
    %s24 = sphi 0, %s23
    %s40 = sphi 0, %s24
    %s44 = sphi 0, %s44
    %s46 = sphi 0, %s44
    %s47 = sphi 0, %s46
    %s61 = sphi 0, %s47
    %s65 = sphi 0, %s65
    %s67 = sphi 0, %s65
    %s68 = sphi 0, %s67
    %s82 = sphi 0, %s68
    %s86 = sphi 0, %s86
    %s88 = sphi 0, %s86
    %s89 = sphi 0, %s88
    %s103 = sphi 0, %s89
    %s109 = sphi 0, %s111
    %s112 = sphi 0, %s109
    %s113 = sphi 0, %s112
    %s129 = sphi 0, %s113
  $region4: #{tpu_custom_call.1} parent=0 // loop_header_branch
    %13 = sbr.rel (%p11) target = $region8
  $region5: #{tpu_custom_call.1} parent=0 // loop_body
    %s15 = ssub.s32 %s10, 1
    %s16 = ssub.s32 %s10, 2
    %s17 = sadd.s32 %s10, 1
    %s18 = ssub.s32 %s10, %s17
    %p19 = scmp.eq.s32.totalorder %s18, 0
    %s21 = sadd.s32 %s20, 1
    %s22 = scalar_select %p19, %s20, %s21
    %p25 = pneg %p19
    %p26 = scmp.eq.s32.totalorder %s10, 1
    %p27 = por %p25, %p26
    %p28 = scmp.ne.s32.totalorder %s20, %s23
    %p29 = scmp.eq.s32.totalorder %s10, 0
    %p30 = por %p28, %p29
    %p31 = scmp.ne.s32.totalorder %s20, %s23
    %p32 = scmp.eq.s32.totalorder %s15, 1
    %p33 = por %p31, %p32
    %p34 = scmp.ne.s32.totalorder %s23, %s24
    %p35 = scmp.eq.s32.totalorder %s15, 0
    %p36 = por %p34, %p35
    %p37 = scmp.ne.s32.totalorder %s23, %s24
    %p38 = scmp.eq.s32.totalorder %s16, 1
    %p39 = por %p37, %p38
    %p41 = scmp.ne.s32.totalorder %s24, %s40
    %p42 = scmp.eq.s32.totalorder %s16, 0
    %p43 = por %p41, %p42
    %s45 = sadd.s32 %s44, 1
    %p48 = scmp.eq.s32.totalorder %s10, 1
    %p49 = scmp.ne.s32.totalorder %s44, %s46
    %p50 = scmp.eq.s32.totalorder %s10, 0
    %p51 = por %p49, %p50
    %p52 = scmp.ne.s32.totalorder %s44, %s46
    %p53 = scmp.eq.s32.totalorder %s15, 1
    %p54 = por %p52, %p53
    %p55 = scmp.ne.s32.totalorder %s46, %s47
    %p56 = scmp.eq.s32.totalorder %s15, 0
    %p57 = por %p55, %p56
    %p58 = scmp.ne.s32.totalorder %s46, %s47
    %p59 = scmp.eq.s32.totalorder %s16, 1
    %p60 = por %p58, %p59
    %p62 = scmp.ne.s32.totalorder %s47, %s61
    %p63 = scmp.eq.s32.totalorder %s16, 0
    %p64 = por %p62, %p63
    %s66 = sadd.s32 %s65, 1
    %p69 = scmp.eq.s32.totalorder %s10, 1
    %p70 = scmp.ne.s32.totalorder %s65, %s67
    %p71 = scmp.eq.s32.totalorder %s10, 0
    %p72 = por %p70, %p71
    %p73 = scmp.ne.s32.totalorder %s65, %s67
    %p74 = scmp.eq.s32.totalorder %s15, 1
    %p75 = por %p73, %p74
    %p76 = scmp.ne.s32.totalorder %s67, %s68
    %p77 = scmp.eq.s32.totalorder %s15, 0
    %p78 = por %p76, %p77
    %p79 = scmp.ne.s32.totalorder %s67, %s68
    %p80 = scmp.eq.s32.totalorder %s16, 1
    %p81 = por %p79, %p80
    %p83 = scmp.ne.s32.totalorder %s68, %s82
    %p84 = scmp.eq.s32.totalorder %s16, 0
    %p85 = por %p83, %p84
    %s87 = sadd.s32 %s86, 1
    %p90 = scmp.eq.s32.totalorder %s10, 1
    %p91 = scmp.ne.s32.totalorder %s86, %s88
    %p92 = scmp.eq.s32.totalorder %s10, 0
    %p93 = por %p91, %p92
    %p94 = scmp.ne.s32.totalorder %s86, %s88
    %p95 = scmp.eq.s32.totalorder %s15, 1
    %p96 = por %p94, %p95
    %p97 = scmp.ne.s32.totalorder %s88, %s89
    %p98 = scmp.eq.s32.totalorder %s15, 0
    %p99 = por %p97, %p98
    %p100 = scmp.ne.s32.totalorder %s88, %s89
    %p101 = scmp.eq.s32.totalorder %s16, 1
    %p102 = por %p100, %p101
    %p104 = scmp.ne.s32.totalorder %s89, %s103
    %p105 = scmp.eq.s32.totalorder %s16, 0
    %p106 = por %p104, %p105
    %s107 = ssub.s32 %s10, %s17
    %p108 = scmp.eq.s32.totalorder %s107, 0
    %s110 = sadd.s32 %s109, 1
    %s111 = scalar_select %p108, %s109, %s110
    %p114 = pneg %p108
    %p115 = scmp.eq.s32.totalorder %s10, 1
    %p116 = por %p114, %p115
    %p117 = scmp.ne.s32.totalorder %s109, %s112
    %p118 = scmp.eq.s32.totalorder %s10, 0
    %p119 = por %p117, %p118
    %p120 = scmp.ne.s32.totalorder %s109, %s112
    %p121 = scmp.eq.s32.totalorder %s15, 1
    %p122 = por %p120, %p121
    %p123 = scmp.ne.s32.totalorder %s112, %s113
    %p124 = scmp.eq.s32.totalorder %s15, 0
    %p125 = por %p123, %p124
    %p126 = scmp.ne.s32.totalorder %s112, %s113
    %p127 = scmp.eq.s32.totalorder %s16, 1
    %p128 = por %p126, %p127
    %p130 = scmp.ne.s32.totalorder %s113, %s129
    %p131 = scmp.eq.s32.totalorder %s16, 0
    %p132 = por %p130, %p131
    %p133 = scmp.le.s32.totalorder 1, %s10
    %p134 = scmp.lt.s32.totalorder %s10, 3
    %p135 = pnand %p133, %p134
    %p136 = pneg %p135
    // Predicated region
    $region9: #{tpu_custom_call.1} parent=5 // pred_check
      _
    $region10: #{tpu_custom_call.1} parent=5 // pred_check_branch
      %138 = sbr.rel (%p135) target = $region12
    $region11: #{tpu_custom_call.1} parent=5 // pred_region
      %s139 = ssub.s32 %s10, 1
      // Predicated region
      $region13: #{tpu_custom_call.1} parent=11 // pred_check
        %p140 = pneg %p57
      $region14: #{tpu_custom_call.1} parent=11 // pred_check_branch
        %142 = sbr.rel (%p140) target = $region16
      $region15: #{tpu_custom_call.1} parent=11 // pred_region
        _
      $region16: #{tpu_custom_call.1} parent=11 // pred_fallthru
        _
      // Predicated region
      $region17: #{tpu_custom_call.1} parent=11 // pred_check
        %p143 = pneg %p78
      $region18: #{tpu_custom_call.1} parent=11 // pred_check_branch
        %145 = sbr.rel (%p143) target = $region20
      $region19: #{tpu_custom_call.1} parent=11 // pred_region
        _
      $region20: #{tpu_custom_call.1} parent=11 // pred_fallthru
        _
      // Predicated region
      $region21: #{tpu_custom_call.1} parent=11 // pred_check
        %p146 = pneg %p99
      $region22: #{tpu_custom_call.1} parent=11 // pred_check_branch
        %148 = sbr.rel (%p146) target = $region24
      $region23: #{tpu_custom_call.1} parent=11 // pred_region
        _
      $region24: #{tpu_custom_call.1} parent=11 // pred_fallthru
        _
    $region12: #{tpu_custom_call.1} parent=5 // pred_fallthru
      _
    %p149 = scmp.lt.s32.totalorder %s10, 2
    // Predicated region
    $region25: #{tpu_custom_call.1} parent=5 // pred_check
      %p150 = pneg %p149
    $region26: #{tpu_custom_call.1} parent=5 // pred_check_branch
      %152 = sbr.rel (%p150) target = $region28
    $region27: #{tpu_custom_call.1} parent=5 // pred_region
      // Predicated region
      $region29: #{tpu_custom_call.1} parent=27 // pred_check
        %p153 = pneg %p30
      $region30: #{tpu_custom_call.1} parent=27 // pred_check_branch
        %155 = sbr.rel (%p153) target = $region32
      $region31: #{tpu_custom_call.1} parent=27 // pred_region
        %s156 = smul.u32 32, %s10
        %p157 = scmp.lt.s32.totalorder %s156, 63
        %s158 = scalar_select %p157, %s156, 63
        %s159 = smul.addr %s158, 4
        %s160 = scalar_lea.vmem %s0, %s159
        %s161 = smul.u32 32, %s10
      $region32: #{tpu_custom_call.1} parent=27 // pred_fallthru
        _
    $region28: #{tpu_custom_call.1} parent=5 // pred_fallthru
      _
    %p162 = scmp.le.s32.totalorder 1, %s10
    %p163 = scmp.lt.s32.totalorder %s10, 3
    %p164 = pnand %p162, %p163
    %p165 = pneg %p164
    // Predicated region
    $region33: #{tpu_custom_call.1} parent=5 // pred_check
      _
    $region34: #{tpu_custom_call.1} parent=5 // pred_check_branch
      %167 = sbr.rel (%p164) target = $region36
    $region35: #{tpu_custom_call.1} parent=5 // pred_region
      %s168 = ssub.s32 %s10, 1
      %s169 = smul.u32 32, %s15
      %p170 = scmp.lt.s32.totalorder %s169, 63
      %s171 = scalar_select %p170, %s169, 63
      %s172 = smul.addr %s171, 4
      %s173 = scalar_lea.vmem %s0, %s172
      %p174 = pneg %p36
      %p175 = pneg %p33
      %p176 = pneg %p57
      %p177 = pneg %p54
      %p178 = pneg %p78
      %p179 = pneg %p75
      %p180 = pneg %p99
      %p181 = pneg %p96
      %p182 = pneg %p125
      %p183 = pneg %p122
      %s184 = smul.u32 32, %s15
      %p185 = scmp.lt.s32.totalorder %s184, 63
      %s186 = scalar_select %p185, %s184, 63
      %s187 = smul.addr %s186, 8
      %s188 = scalar_lea.vmem %s4, %s187
      %s189 = smul.u32 32, %s15
      %p190 = scmp.lt.s32.totalorder %s189, 63
      %s191 = scalar_select %p190, %s189, 63
      %s192 = smul.addr %s191, 4
      %s193 = scalar_lea.vmem %s0, %s192
      %s194 = smul.u32 32, %s15
      %s195 = smul.u32 32, %s15
      %p196 = scmp.lt.s32.totalorder %s195, 63
      %s197 = scalar_select %p196, %s195, 63
      %s198 = smul.addr %s197, 8
      %s199 = scalar_lea.vmem %s4, %s198
      %s200 = smul.u32 32, %s15
      %v202 = vld [vmem:[%s193] sm:$0xf]
      %v203 = vld [vmem:[%s193 + $0x4] sm:$0xf]
      %v204 = vld [vmem:[%s193 + $0x8] sm:$0xf]
      %v205 = vld [vmem:[%s193 + $0xc] sm:$0xf]
      %v206 = vld [vmem:[%s193 + $0x10] sm:$0xf]
      %v207 = vld [vmem:[%s193 + $0x14] sm:$0xf]
      %v208 = vld [vmem:[%s193 + $0x18] sm:$0xf]
      %v209 = vld [vmem:[%s193 + $0x1c] sm:$0xf]
      %v210 = vld [vmem:[%s193 + $0x20] sm:$0xf]
      %v211 = vld [vmem:[%s193 + $0x24] sm:$0xf]
      %v212 = vld [vmem:[%s193 + $0x28] sm:$0xf]
      %v213 = vld [vmem:[%s193 + $0x2c] sm:$0xf]
      %v214 = vld [vmem:[%s193 + $0x30] sm:$0xf]
      %v215 = vld [vmem:[%s193 + $0x34] sm:$0xf]
      %v216 = vld [vmem:[%s193 + $0x38] sm:$0xf]
      %v217 = vld [vmem:[%s193 + $0x3c] sm:$0xf]
      %v218 = vld [vmem:[%s193 + $0x40] sm:$0xf]
      %v219 = vld [vmem:[%s193 + $0x44] sm:$0xf]
      %v220 = vld [vmem:[%s193 + $0x48] sm:$0xf]
      %v221 = vld [vmem:[%s193 + $0x4c] sm:$0xf]
      %v222 = vld [vmem:[%s193 + $0x50] sm:$0xf]
      %v223 = vld [vmem:[%s193 + $0x54] sm:$0xf]
      %v224 = vld [vmem:[%s193 + $0x58] sm:$0xf]
      %v225 = vld [vmem:[%s193 + $0x5c] sm:$0xf]
      %v226 = vld [vmem:[%s193 + $0x60] sm:$0xf]
      %v227 = vld [vmem:[%s193 + $0x64] sm:$0xf]
      %v228 = vld [vmem:[%s193 + $0x68] sm:$0xf]
      %v229 = vld [vmem:[%s193 + $0x6c] sm:$0xf]
      %v230 = vld [vmem:[%s193 + $0x70] sm:$0xf]
      %v231 = vld [vmem:[%s193 + $0x74] sm:$0xf]
      %v232 = vld [vmem:[%s193 + $0x78] sm:$0xf]
      %v233 = vld [vmem:[%s193 + $0x7c] sm:$0xf]
      %v234 = vld [vmem:[%s1] sm:$0xf]
      %v267 = vunpack.c.l.b16 %v202
      %v268 = vunpack.c.l.b16 %v203
      %v269 = vunpack.c.l.b16 %v204
      %v270 = vunpack.c.l.b16 %v205
      %v271 = vunpack.c.l.b16 %v206
      %v272 = vunpack.c.l.b16 %v207
      %v273 = vunpack.c.l.b16 %v208
      %v274 = vunpack.c.l.b16 %v209
      %v275 = vunpack.c.l.b16 %v210
      %v276 = vunpack.c.l.b16 %v211
      %v277 = vunpack.c.l.b16 %v212
      %v278 = vunpack.c.l.b16 %v213
      %v279 = vunpack.c.l.b16 %v214
      %v280 = vunpack.c.l.b16 %v215
      %v281 = vunpack.c.l.b16 %v216
      %v282 = vunpack.c.l.b16 %v217
      %v283 = vunpack.c.l.b16 %v218
      %v284 = vunpack.c.l.b16 %v219
      %v285 = vunpack.c.l.b16 %v220
      %v286 = vunpack.c.l.b16 %v221
      %v287 = vunpack.c.l.b16 %v222
      %v288 = vunpack.c.l.b16 %v223
      %v289 = vunpack.c.l.b16 %v224
      %v290 = vunpack.c.l.b16 %v225
      %v291 = vunpack.c.l.b16 %v226
      %v292 = vunpack.c.l.b16 %v227
      %v293 = vunpack.c.l.b16 %v228
      %v294 = vunpack.c.l.b16 %v229
      %v295 = vunpack.c.l.b16 %v230
      %v296 = vunpack.c.l.b16 %v231
      %v297 = vunpack.c.l.b16 %v232
      %v298 = vunpack.c.l.b16 %v233
      %v299 = vpack.c.b16 %v268, %v267
      %v300 = vpack.c.b16 %v270, %v269
      %v301 = vpack.c.b16 %v272, %v271
      %v302 = vpack.c.b16 %v274, %v273
      %v303 = vpack.c.b16 %v276, %v275
      %v304 = vpack.c.b16 %v278, %v277
      %v305 = vpack.c.b16 %v280, %v279
      %v306 = vpack.c.b16 %v282, %v281
      %v307 = vpack.c.b16 %v284, %v283
      %v308 = vpack.c.b16 %v286, %v285
      %v309 = vpack.c.b16 %v288, %v287
      %v310 = vpack.c.b16 %v290, %v289
      %v311 = vpack.c.b16 %v292, %v291
      %v312 = vpack.c.b16 %v294, %v293
      %v313 = vpack.c.b16 %v296, %v295
      %v314 = vpack.c.b16 %v298, %v297
      %vm315 = vcmask 64512
      %v317 = vsel %vm315, %v299, 0
      %v320 = vsel %vm315, %v300, 0
      %v323 = vsel %vm315, %v301, 0
      %v326 = vsel %vm315, %v302, 0
      %v329 = vsel %vm315, %v303, 0
      %v332 = vsel %vm315, %v304, 0
      %v335 = vsel %vm315, %v305, 0
      %v338 = vsel %vm315, %v306, 0
      %v341 = vsel %vm315, %v307, 0
      %v344 = vsel %vm315, %v308, 0
      %v347 = vsel %vm315, %v309, 0
      %v350 = vsel %vm315, %v310, 0
      %v353 = vsel %vm315, %v311, 0
      %v356 = vsel %vm315, %v312, 0
      %v359 = vsel %vm315, %v313, 0
      %v362 = vsel %vm315, %v314, 0
      %vm364 = vcmask 1043456
      %v366 = vsel %vm364, %v234, 0
      %368 = vmatpush.bf16.msra.mxu0 0
      %369 = vmatpush.bf16.msra.mxu0 0
      %370 = vmatpush.bf16.msra.mxu0 0
      %371 = vmatpush.bf16.msra.mxu0 0
      %372 = vmatpush.bf16.msra.mxu0 0
      %373 = vmatpush.bf16.msra.mxu0 0
      %374 = vmatpush.bf16.msra.mxu0 0
      %375 = vmatpush.bf16.msra.mxu0 %v366
      %376 = vmatmul.bf16.gmra.mxu0 %v317
      %v377 = vpop.f32.mrf.mxu0
      %v378 = vadd.f32 0.0, %v377
      %v379 = vpop.f32.mrf.mxu0
      %v380 = vadd.f32 0.0, %v379
      %381 = vmatmul.bf16.gmra.mxu0 %v320
      %v382 = vpop.f32.mrf.mxu0
      %v383 = vadd.f32 0.0, %v382
      %v384 = vpop.f32.mrf.mxu0
      %v385 = vadd.f32 0.0, %v384
      %386 = vmatmul.bf16.gmra.mxu0 %v323
      %v387 = vpop.f32.mrf.mxu0
      %v388 = vadd.f32 0.0, %v387
      %v389 = vpop.f32.mrf.mxu0
      %v390 = vadd.f32 0.0, %v389
      %391 = vmatmul.bf16.gmra.mxu0 %v326
      %v392 = vpop.f32.mrf.mxu0
      %v393 = vadd.f32 0.0, %v392
      %v394 = vpop.f32.mrf.mxu0
      %v395 = vadd.f32 0.0, %v394
      %396 = vmatmul.bf16.gmra.mxu0 %v329
      %v397 = vpop.f32.mrf.mxu0
      %v398 = vadd.f32 0.0, %v397
      %v399 = vpop.f32.mrf.mxu0
      %v400 = vadd.f32 0.0, %v399
      %401 = vmatmul.bf16.gmra.mxu0 %v332
      %v402 = vpop.f32.mrf.mxu0
      %v403 = vadd.f32 0.0, %v402
      %v404 = vpop.f32.mrf.mxu0
      %v405 = vadd.f32 0.0, %v404
      %406 = vmatmul.bf16.gmra.mxu0 %v335
      %v407 = vpop.f32.mrf.mxu0
      %v408 = vadd.f32 0.0, %v407
      %v409 = vpop.f32.mrf.mxu0
      %v410 = vadd.f32 0.0, %v409
      %411 = vmatmul.bf16.gmra.mxu0 %v338
      %v412 = vpop.f32.mrf.mxu0
      %v413 = vadd.f32 0.0, %v412
      %v414 = vpop.f32.mrf.mxu0
      %v415 = vadd.f32 0.0, %v414
      %416 = vmatmul.bf16.gmra.mxu0 %v341
      %v417 = vpop.f32.mrf.mxu0
      %v418 = vadd.f32 0.0, %v417
      %v419 = vpop.f32.mrf.mxu0
      %v420 = vadd.f32 0.0, %v419
      %421 = vmatmul.bf16.gmra.mxu0 %v344
      %v422 = vpop.f32.mrf.mxu0
      %v423 = vadd.f32 0.0, %v422
      %v424 = vpop.f32.mrf.mxu0
      %v425 = vadd.f32 0.0, %v424
      %426 = vmatmul.bf16.gmra.mxu0 %v347
      %v427 = vpop.f32.mrf.mxu0
      %v428 = vadd.f32 0.0, %v427
      %v429 = vpop.f32.mrf.mxu0
      %v430 = vadd.f32 0.0, %v429
      %431 = vmatmul.bf16.gmra.mxu0 %v350
      %v432 = vpop.f32.mrf.mxu0
      %v433 = vadd.f32 0.0, %v432
      %v434 = vpop.f32.mrf.mxu0
      %v435 = vadd.f32 0.0, %v434
      %436 = vmatmul.bf16.gmra.mxu0 %v353
      %v437 = vpop.f32.mrf.mxu0
      %v438 = vadd.f32 0.0, %v437
      %v439 = vpop.f32.mrf.mxu0
      %v440 = vadd.f32 0.0, %v439
      %441 = vmatmul.bf16.gmra.mxu0 %v356
      %v442 = vpop.f32.mrf.mxu0
      %v443 = vadd.f32 0.0, %v442
      %v444 = vpop.f32.mrf.mxu0
      %v445 = vadd.f32 0.0, %v444
      %446 = vmatmul.bf16.gmra.mxu0 %v359
      %v447 = vpop.f32.mrf.mxu0
      %v448 = vadd.f32 0.0, %v447
      %v449 = vpop.f32.mrf.mxu0
      %v450 = vadd.f32 0.0, %v449
      %451 = vmatmul.bf16.gmra.mxu0 %v362
      %v452 = vpop.f32.mrf.mxu0
      %v453 = vadd.f32 0.0, %v452
      %v454 = vpop.f32.mrf.mxu0
      %v455 = vadd.f32 0.0, %v454
      %456 = vdwg.mxu0
      %v457 = vld [vmem:[%s2] sm:$0x1]
      %v459 = vperm.slane %v457, 0
      %v461 = vmul.f32 %v378, %v459
      %v462 = vmul.f32 %v380, %v459
      %v463 = vmul.f32 %v383, %v459
      %v464 = vmul.f32 %v385, %v459
      %v465 = vmul.f32 %v388, %v459
      %v466 = vmul.f32 %v390, %v459
      %v467 = vmul.f32 %v393, %v459
      %v468 = vmul.f32 %v395, %v459
      %v469 = vmul.f32 %v398, %v459
      %v470 = vmul.f32 %v400, %v459
      %v471 = vmul.f32 %v403, %v459
      %v472 = vmul.f32 %v405, %v459
      %v473 = vmul.f32 %v408, %v459
      %v474 = vmul.f32 %v410, %v459
      %v475 = vmul.f32 %v413, %v459
      %v476 = vmul.f32 %v415, %v459
      %v477 = vmul.f32 %v418, %v459
      %v478 = vmul.f32 %v420, %v459
      %v479 = vmul.f32 %v423, %v459
      %v480 = vmul.f32 %v425, %v459
      %v481 = vmul.f32 %v428, %v459
      %v482 = vmul.f32 %v430, %v459
      %v483 = vmul.f32 %v433, %v459
      %v484 = vmul.f32 %v435, %v459
      %v485 = vmul.f32 %v438, %v459
      %v486 = vmul.f32 %v440, %v459
      %v487 = vmul.f32 %v443, %v459
      %v488 = vmul.f32 %v445, %v459
      %v489 = vmul.f32 %v448, %v459
      %v490 = vmul.f32 %v450, %v459
      %v491 = vmul.f32 %v453, %v459
      %v492 = vmul.f32 %v455, %v459
      %v493 = vld [vmem:[%s3] sm:$0x1]
      %v495 = vperm.slane %v493, 0
      %v497 = vadd.f32 %v461, %v495
      %v498 = vadd.f32 %v462, %v495
      %v499 = vadd.f32 %v463, %v495
      %v500 = vadd.f32 %v464, %v495
      %v501 = vadd.f32 %v465, %v495
      %v502 = vadd.f32 %v466, %v495
      %v503 = vadd.f32 %v467, %v495
      %v504 = vadd.f32 %v468, %v495
      %v505 = vadd.f32 %v469, %v495
      %v506 = vadd.f32 %v470, %v495
      %v507 = vadd.f32 %v471, %v495
      %v508 = vadd.f32 %v472, %v495
      %v509 = vadd.f32 %v473, %v495
      %v510 = vadd.f32 %v474, %v495
      %v511 = vadd.f32 %v475, %v495
      %v512 = vadd.f32 %v476, %v495
      %v513 = vadd.f32 %v477, %v495
      %v514 = vadd.f32 %v478, %v495
      %v515 = vadd.f32 %v479, %v495
      %v516 = vadd.f32 %v480, %v495
      %v517 = vadd.f32 %v481, %v495
      %v518 = vadd.f32 %v482, %v495
      %v519 = vadd.f32 %v483, %v495
      %v520 = vadd.f32 %v484, %v495
      %v521 = vadd.f32 %v485, %v495
      %v522 = vadd.f32 %v486, %v495
      %v523 = vadd.f32 %v487, %v495
      %v524 = vadd.f32 %v488, %v495
      %v525 = vadd.f32 %v489, %v495
      %v526 = vadd.f32 %v490, %v495
      %v527 = vadd.f32 %v491, %v495
      %v528 = vadd.f32 %v492, %v495
      %v529 = vmax.f32 %v497, 0.0
      %v530 = vmax.f32 %v498, 0.0
      %v531 = vmax.f32 %v499, 0.0
      %v532 = vmax.f32 %v500, 0.0
      %v533 = vmax.f32 %v501, 0.0
      %v534 = vmax.f32 %v502, 0.0
      %v535 = vmax.f32 %v503, 0.0
      %v536 = vmax.f32 %v504, 0.0
      %v537 = vmax.f32 %v505, 0.0
      %v538 = vmax.f32 %v506, 0.0
      %v539 = vmax.f32 %v507, 0.0
      %v540 = vmax.f32 %v508, 0.0
      %v541 = vmax.f32 %v509, 0.0
      %v542 = vmax.f32 %v510, 0.0
      %v543 = vmax.f32 %v511, 0.0
      %v544 = vmax.f32 %v512, 0.0
      %v545 = vmax.f32 %v513, 0.0
      %v546 = vmax.f32 %v514, 0.0
      %v547 = vmax.f32 %v515, 0.0
      %v548 = vmax.f32 %v516, 0.0
      %v549 = vmax.f32 %v517, 0.0
      %v550 = vmax.f32 %v518, 0.0
      %v551 = vmax.f32 %v519, 0.0
      %v552 = vmax.f32 %v520, 0.0
      %v553 = vmax.f32 %v521, 0.0
      %v554 = vmax.f32 %v522, 0.0
      %v555 = vmax.f32 %v523, 0.0
      %v556 = vmax.f32 %v524, 0.0
      %v557 = vmax.f32 %v525, 0.0
      %v558 = vmax.f32 %v526, 0.0
      %v559 = vmax.f32 %v527, 0.0
      %v560 = vmax.f32 %v528, 0.0
      %vm561 = vcmask 130048
      %562 = vst.msk [vmem:[%s199] sm:$0xff] %vm561, %v529
      %563 = vst.msk [vmem:[%s199 + $0x8] sm:$0xff] %vm561, %v530
      %564 = vst.msk [vmem:[%s199 + $0x10] sm:$0xff] %vm561, %v531
      %565 = vst.msk [vmem:[%s199 + $0x18] sm:$0xff] %vm561, %v532
      %566 = vst.msk [vmem:[%s199 + $0x20] sm:$0xff] %vm561, %v533
      %567 = vst.msk [vmem:[%s199 + $0x28] sm:$0xff] %vm561, %v534
      %568 = vst.msk [vmem:[%s199 + $0x30] sm:$0xff] %vm561, %v535
      %569 = vst.msk [vmem:[%s199 + $0x38] sm:$0xff] %vm561, %v536
      %570 = vst.msk [vmem:[%s199 + $0x40] sm:$0xff] %vm561, %v537
      %571 = vst.msk [vmem:[%s199 + $0x48] sm:$0xff] %vm561, %v538
      %572 = vst.msk [vmem:[%s199 + $0x50] sm:$0xff] %vm561, %v539
      %573 = vst.msk [vmem:[%s199 + $0x58] sm:$0xff] %vm561, %v540
      %574 = vst.msk [vmem:[%s199 + $0x60] sm:$0xff] %vm561, %v541
      %575 = vst.msk [vmem:[%s199 + $0x68] sm:$0xff] %vm561, %v542
      %576 = vst.msk [vmem:[%s199 + $0x70] sm:$0xff] %vm561, %v543
      %577 = vst.msk [vmem:[%s199 + $0x78] sm:$0xff] %vm561, %v544
      %578 = vst.msk [vmem:[%s199 + $0x80] sm:$0xff] %vm561, %v545
      %579 = vst.msk [vmem:[%s199 + $0x88] sm:$0xff] %vm561, %v546
      %580 = vst.msk [vmem:[%s199 + $0x90] sm:$0xff] %vm561, %v547
      %581 = vst.msk [vmem:[%s199 + $0x98] sm:$0xff] %vm561, %v548
      %582 = vst.msk [vmem:[%s199 + $0xa0] sm:$0xff] %vm561, %v549
      %583 = vst.msk [vmem:[%s199 + $0xa8] sm:$0xff] %vm561, %v550
      %584 = vst.msk [vmem:[%s199 + $0xb0] sm:$0xff] %vm561, %v551
      %585 = vst.msk [vmem:[%s199 + $0xb8] sm:$0xff] %vm561, %v552
      %586 = vst.msk [vmem:[%s199 + $0xc0] sm:$0xff] %vm561, %v553
      %587 = vst.msk [vmem:[%s199 + $0xc8] sm:$0xff] %vm561, %v554
      %588 = vst.msk [vmem:[%s199 + $0xd0] sm:$0xff] %vm561, %v555
      %589 = vst.msk [vmem:[%s199 + $0xd8] sm:$0xff] %vm561, %v556
      %590 = vst.msk [vmem:[%s199 + $0xe0] sm:$0xff] %vm561, %v557
      %591 = vst.msk [vmem:[%s199 + $0xe8] sm:$0xff] %vm561, %v558
      %592 = vst.msk [vmem:[%s199 + $0xf0] sm:$0xff] %vm561, %v559
      %593 = vst.msk [vmem:[%s199 + $0xf8] sm:$0xff] %vm561, %v560
      %s594 = smul.u32 32, %s15
      %p595 = scmp.lt.s32.totalorder %s594, 63
      %s596 = scalar_select %p595, %s594, 63
      %s597 = smul.addr %s596, 8
      %s598 = scalar_lea.vmem %s4, %s597
      // Predicated region
      $region37: #{tpu_custom_call.1} parent=35 // pred_check
        %p599 = pneg %p122
      $region38: #{tpu_custom_call.1} parent=35 // pred_check_branch
        %601 = sbr.rel (%p599) target = $region40
      $region39: #{tpu_custom_call.1} parent=35 // pred_region
        %s602 = smul.u32 32, %s15
      $region40: #{tpu_custom_call.1} parent=35 // pred_fallthru
        _
    $region36: #{tpu_custom_call.1} parent=5 // pred_fallthru
      _
    %p603 = scmp.le.s32.totalorder 2, %s10
    // Predicated region
    $region41: #{tpu_custom_call.1} parent=5 // pred_check
      %p604 = pneg %p603
    $region42: #{tpu_custom_call.1} parent=5 // pred_check_branch
      %606 = sbr.rel (%p604) target = $region44
    $region43: #{tpu_custom_call.1} parent=5 // pred_region
      %s607 = ssub.s32 %s10, 2
      // Predicated region
      $region45: #{tpu_custom_call.1} parent=43 // pred_check
        %p608 = pneg %p128
      $region46: #{tpu_custom_call.1} parent=43 // pred_check_branch
        %610 = sbr.rel (%p608) target = $region48
      $region47: #{tpu_custom_call.1} parent=43 // pred_region
        %s611 = smul.u32 32, %s16
        %p612 = scmp.lt.s32.totalorder %s611, 63
        %s613 = scalar_select %p612, %s611, 63
        %s614 = smul.addr %s613, 8
        %s615 = scalar_lea.vmem %s4, %s614
      $region48: #{tpu_custom_call.1} parent=43 // pred_fallthru
        _
    $region44: #{tpu_custom_call.1} parent=5 // pred_fallthru
      _
  $region6: #{tpu_custom_call.1} parent=0 // loop_footer
    %s14 = sadd.s32 1, %s10
  $region7: #{tpu_custom_call.1} parent=0 // loop_footer_branch
    %9 = sbr.rel target = $region3
  $region8: #{tpu_custom_call.1} parent=0 // loop_exit
    _

</llo_original>
